<compile_context>
chip_gen: v5e
topology: v5e:2x2
jax: 0.10.0
libtpu: 0.0.40
codegen_flags: <defaults>
</compile_context>

<pallas_src>
import functools

import jax
import jax.numpy as jnp
from jax.experimental import pallas as pl
from jax.experimental.pallas import tpu as pltpu


OUT_PAD = 128  # lane-dense padded width of the logits output


def _round_up(n, m):
    return ((n + m - 1) // m) * m


def cfcn_kernel(x_ref, w1_ref, b1_ref, w2_ref, b2_ref, w3_ref, b3_ref,
                out_ref, scores_ref, *, matmul_dtype):
    """One batch tile: x [TB, F] -> scores [TB, F], padded logits [TB, OUT_PAD]."""
    x = x_ref[...]                                            # [TB, F] f32

    # fc1 + ReLU (matmul operands in matmul_dtype, accumulate + bias in f32)
    h = jnp.dot(x.astype(matmul_dtype), w1_ref[...],
                preferred_element_type=jnp.float32)           # [TB, H]
    h = jnp.maximum(h + b1_ref[...], 0.0)

    # fc2 + sigmoid -> feature-contribution scores
    s = jnp.dot(h.astype(matmul_dtype), w2_ref[...],
                preferred_element_type=jnp.float32)           # [TB, F]
    s = jax.nn.sigmoid(s + b2_ref[...])
    scores_ref[...] = s

    # fc3 on the gated input. W3/b3 are zero-padded to OUT_PAD lanes so this
    # produces a full 128-lane MXU output tile and an unmasked 128-lane store.
    gated = (s * x).astype(matmul_dtype)                      # [TB, F]
    o = jnp.dot(gated, w3_ref[...],
                preferred_element_type=jnp.float32)           # [TB, OUT_PAD]
    out_ref[...] = o + b3_ref[...]


def cfcn_forward(x, params, *, tile_b=1024, matmul_dtype=jnp.float32):
    """x: [B, F] float32. params: dict of [in, out]-layout weights & biases."""
    B, F = x.shape
    H = params["w1"].shape[1]
    n_out = params["w3"].shape[1]

    # Batch tile: multiple of 8 (sublane), capped at the 8-rounded batch so a
    # tiny B doesn't get padded out to the full default tile.
    tile_b = max(8, min(_round_up(tile_b, 8), _round_up(B, 8)))
    b_padded = _round_up(B, tile_b)
    if b_padded != B:
        x = jnp.pad(x, ((0, b_padded - B), (0, 0)))

    # Matmul operands (optionally bf16 on v6e/v7x); biases stay f32.
    w1 = params["w1"].astype(matmul_dtype)
    w2 = params["w2"].astype(matmul_dtype)
    w3 = jnp.zeros((F, OUT_PAD), matmul_dtype).at[:, :n_out].set(
        params["w3"].astype(matmul_dtype))
    b1 = params["b1"]
    b2 = params["b2"]
    b3 = jnp.zeros((1, OUT_PAD), jnp.float32).at[:, :n_out].set(params["b3"])

    grid = (b_padded // tile_b,)
    resident = lambda i: (0, 0)   # weights/biases: same block every grid step

    out_shapes = (
        jax.ShapeDtypeStruct((b_padded, OUT_PAD), jnp.float32),  # padded logits
        jax.ShapeDtypeStruct((b_padded, F), jnp.float32),        # scores
    )
    out_pad, scores = pl.pallas_call(
        functools.partial(cfcn_kernel, matmul_dtype=matmul_dtype),
        out_shape=out_shapes,
        grid=grid,
        in_specs=[
            pl.BlockSpec((tile_b, F), lambda i: (i, 0)),    # x (pipelined)
            pl.BlockSpec((F, H), resident),                 # w1
            pl.BlockSpec((1, H), resident),                 # b1
            pl.BlockSpec((H, F), resident),                 # w2
            pl.BlockSpec((1, F), resident),                 # b2
            pl.BlockSpec((F, OUT_PAD), resident),           # w3 (lane-padded)
            pl.BlockSpec((1, OUT_PAD), resident),           # b3 (lane-padded)
        ],
        out_specs=(
            pl.BlockSpec((tile_b, OUT_PAD), lambda i: (i, 0)),
            pl.BlockSpec((tile_b, F), lambda i: (i, 0)),
        ),
        compiler_params=pltpu.CompilerParams(
            dimension_semantics=("parallel",)),
    )(x, w1, b1, w2, b2, w3, b3)

    return out_pad[:B, :n_out], scores[:B]


def init_cfcn_params(key, input_dim, hidden_dim=128):
    """Deterministic init matching nn.Linear's U(-1/sqrt(fan_in), 1/sqrt(fan_in)).
    Weights are stored transposed ([in, out]) for the kernel's x @ W layout.
    Biases are stored as [1, out] so they broadcast over the batch in-kernel."""
    ks = jax.random.split(key, 6)

    def lin(kw, kb, fan_in, fan_out):
        bound = 1.0 / jnp.sqrt(jnp.float32(fan_in))
        w = jax.random.uniform(kw, (fan_in, fan_out), jnp.float32, -bound, bound)
        b = jax.random.uniform(kb, (1, fan_out), jnp.float32, -bound, bound)
        return w, b

    w1, b1 = lin(ks[0], ks[1], input_dim, hidden_dim)   # fc1
    w2, b2 = lin(ks[2], ks[3], hidden_dim, input_dim)   # fc2
    w3, b3 = lin(ks[4], ks[5], input_dim, 2)            # fc3
    return {"w1": w1, "b1": b1, "w2": w2, "b2": b2, "w3": w3, "b3": b3}


def cfcn_reference(x, p):
    """Pure-JAX reference for correctness checking."""
    h = jnp.maximum(x @ p["w1"] + p["b1"], 0.0)
    s = jax.nn.sigmoid(h @ p["w2"] + p["b2"])
    o = (s * x) @ p["w3"] + p["b3"]
    return o, s


if __name__ == "__main__":
    key = jax.random.PRNGKey(0)
    k_params, k_x = jax.random.split(key)

    batch, input_dim, hidden_dim = 8, 16, 128
    params = init_cfcn_params(k_params, input_dim, hidden_dim)
    x = jax.random.normal(k_x, (batch, input_dim), jnp.float32)

    ref_out, ref_scores = cfcn_reference(x, params)

    # Exact (f32-matmul) path — matches the PyTorch semantics tightly.
    out, scores = cfcn_forward(x, params)
    out = jax.block_until_ready(out)
    scores = jax.block_until_ready(scores)
    assert out.shape == (batch, 2) and scores.shape == (batch, input_dim)
    assert jnp.allclose(out, ref_out, atol=1e-5, rtol=1e-5)
    assert jnp.allclose(scores, ref_scores, atol=1e-5, rtol=1e-5)

    # bf16 matmul-operand path (recommended on v6e/v7x) — looser tolerance.
    out_bf, scores_bf = cfcn_forward(x, params, matmul_dtype=jnp.bfloat16)
    out_bf = jax.block_until_ready(out_bf)
    assert jnp.allclose(out_bf, ref_out, atol=5e-2, rtol=5e-2)
    assert jnp.allclose(scores_bf, ref_scores, atol=5e-2, rtol=5e-2)

    print("KERNEL_OK")
</pallas_src>

<mosaic_0001>
module attributes {stable_mosaic.version = 11 : i64} {
  func.func @cfcn_kernel(%arg0: i32, %arg1: memref<8x16xf32, #tpu.memory_space<vmem>>, %arg2: memref<16x128xf32, #tpu.memory_space<vmem>>, %arg3: memref<1x128xf32, #tpu.memory_space<vmem>>, %arg4: memref<128x16xf32, #tpu.memory_space<vmem>>, %arg5: memref<1x16xf32, #tpu.memory_space<vmem>>, %arg6: memref<16x128xf32, #tpu.memory_space<vmem>>, %arg7: memref<1x128xf32, #tpu.memory_space<vmem>>, %arg8: memref<8x128xf32, #tpu.memory_space<vmem>>, %arg9: memref<8x16xf32, #tpu.memory_space<vmem>>) attributes {dimension_semantics = [#tpu.dimension_semantics<parallel>], iteration_bounds = array<i64: 1>, scalar_prefetch = 0 : i64, scratch_operands = 0 : i64, tpu.core_type = #tpu.core_type<tc>, window_params = [{transform_indices = @transform_0, window_bounds = array<i64: 8, 16>}, {pipeline_mode = #tpu.pipeline_mode<synchronous>, transform_indices = @transform_1, window_bounds = array<i64: 16, 128>}, {pipeline_mode = #tpu.pipeline_mode<synchronous>, transform_indices = @transform_2, window_bounds = array<i64: 1, 128>}, {pipeline_mode = #tpu.pipeline_mode<synchronous>, transform_indices = @transform_3, window_bounds = array<i64: 128, 16>}, {pipeline_mode = #tpu.pipeline_mode<synchronous>, transform_indices = @transform_4, window_bounds = array<i64: 1, 16>}, {pipeline_mode = #tpu.pipeline_mode<synchronous>, transform_indices = @transform_5, window_bounds = array<i64: 16, 128>}, {pipeline_mode = #tpu.pipeline_mode<synchronous>, transform_indices = @transform_6, window_bounds = array<i64: 1, 128>}, {transform_indices = @transform_7, window_bounds = array<i64: 8, 128>}, {transform_indices = @transform_8, window_bounds = array<i64: 8, 16>}]} {
    %c0 = arith.constant 0 : index
    %c0_0 = arith.constant 0 : index
    %0 = vector.load %arg1[%c0, %c0_0] : memref<8x16xf32, #tpu.memory_space<vmem>>, vector<8x16xf32>
    %c0_1 = arith.constant 0 : index
    %c0_2 = arith.constant 0 : index
    %1 = vector.load %arg2[%c0_1, %c0_2] : memref<16x128xf32, #tpu.memory_space<vmem>>, vector<16x128xf32>
    %cst = arith.constant dense<0.000000e+00> : vector<8x128xf32>
    %2 = tpu.matmul %0, %1, %cst {dimension_numbers = #tpu.dot_dimension_numbers<[1], [0], [0], [1], [0, 0, 1, 1], [], []>} : vector<8x16xf32>, vector<16x128xf32>, vector<8x128xf32> -> vector<8x128xf32>
    %c0_3 = arith.constant 0 : index
    %c0_4 = arith.constant 0 : index
    %3 = vector.load %arg3[%c0_3, %c0_4] : memref<1x128xf32, #tpu.memory_space<vmem>>, vector<1x128xf32>
    %4 = vector.broadcast %3 : vector<1x128xf32> to vector<8x128xf32>
    %5 = arith.addf %2, %4 : vector<8x128xf32>
    %cst_5 = arith.constant 0.000000e+00 : f32
    %6 = vector.broadcast %cst_5 : f32 to vector<8x128xf32>
    %7 = arith.maximumf %5, %6 : vector<8x128xf32>
    %c0_6 = arith.constant 0 : index
    %c0_7 = arith.constant 0 : index
    %8 = vector.load %arg4[%c0_6, %c0_7] : memref<128x16xf32, #tpu.memory_space<vmem>>, vector<128x16xf32>
    %cst_8 = arith.constant dense<0.000000e+00> : vector<8x16xf32>
    %9 = tpu.matmul %7, %8, %cst_8 {dimension_numbers = #tpu.dot_dimension_numbers<[1], [0], [0], [1], [0, 0, 1, 1], [], []>} : vector<8x128xf32>, vector<128x16xf32>, vector<8x16xf32> -> vector<8x16xf32>
    %c0_9 = arith.constant 0 : index
    %c0_10 = arith.constant 0 : index
    %10 = vector.load %arg5[%c0_9, %c0_10] : memref<1x16xf32, #tpu.memory_space<vmem>>, vector<1x16xf32>
    %11 = vector.broadcast %10 : vector<1x16xf32> to vector<8x16xf32>
    %12 = arith.addf %9, %11 : vector<8x16xf32>
    %13 = arith.negf %12 : vector<8x16xf32>
    %14 = math.exp %13 : vector<8x16xf32>
    %cst_11 = arith.constant 1.000000e+00 : f32
    %15 = vector.broadcast %cst_11 : f32 to vector<8x16xf32>
    %16 = arith.addf %15, %14 : vector<8x16xf32>
    %17 = arith.divf %15, %16 : vector<8x16xf32>
    %c0_12 = arith.constant 0 : index
    %c0_13 = arith.constant 0 : index
    %18 = vector.load %arg9[%c0_12, %c0_13] : memref<8x16xf32, #tpu.memory_space<vmem>>, vector<8x16xf32>
    tpu.vector_store %arg9[%c0_12, %c0_13], %17 {strides = array<i32>} : memref<8x16xf32, #tpu.memory_space<vmem>>, vector<8x16xf32>,
    %19 = arith.mulf %17, %0 : vector<8x16xf32>
    %c0_14 = arith.constant 0 : index
    %c0_15 = arith.constant 0 : index
    %20 = vector.load %arg6[%c0_14, %c0_15] : memref<16x128xf32, #tpu.memory_space<vmem>>, vector<16x128xf32>
    %cst_16 = arith.constant dense<0.000000e+00> : vector<8x128xf32>
    %21 = tpu.matmul %19, %20, %cst_16 {dimension_numbers = #tpu.dot_dimension_numbers<[1], [0], [0], [1], [0, 0, 1, 1], [], []>} : vector<8x16xf32>, vector<16x128xf32>, vector<8x128xf32> -> vector<8x128xf32>
    %c0_17 = arith.constant 0 : index
    %c0_18 = arith.constant 0 : index
    %22 = vector.load %arg7[%c0_17, %c0_18] : memref<1x128xf32, #tpu.memory_space<vmem>>, vector<1x128xf32>
    %23 = vector.broadcast %22 : vector<1x128xf32> to vector<8x128xf32>
    %24 = arith.addf %21, %23 : vector<8x128xf32>
    %c0_19 = arith.constant 0 : index
    %c0_20 = arith.constant 0 : index
    %25 = vector.load %arg8[%c0_19, %c0_20] : memref<8x128xf32, #tpu.memory_space<vmem>>, vector<8x128xf32>
    tpu.vector_store %arg8[%c0_19, %c0_20], %24 {strides = array<i32>} : memref<8x128xf32, #tpu.memory_space<vmem>>, vector<8x128xf32>,
    return
  }
  func.func @transform_0(%arg0: i32) -> (i32, i32) {
    %c0_i32 = arith.constant 0 : i32
    %c0_i32_0 = arith.constant 0 : i32
    return %arg0, %c0_i32 : i32, i32
  }
  func.func @transform_1(%arg0: i32) -> (i32, i32) {
    %c0_i32 = arith.constant 0 : i32
    %c0_i32_0 = arith.constant 0 : i32
    %c0_i32_1 = arith.constant 0 : i32
    return %c0_i32, %c0_i32_0 : i32, i32
  }
  func.func @transform_2(%arg0: i32) -> (i32, i32) {
    %c0_i32 = arith.constant 0 : i32
    %c0_i32_0 = arith.constant 0 : i32
    %c0_i32_1 = arith.constant 0 : i32
    return %c0_i32, %c0_i32_0 : i32, i32
  }
  func.func @transform_3(%arg0: i32) -> (i32, i32) {
    %c0_i32 = arith.constant 0 : i32
    %c0_i32_0 = arith.constant 0 : i32
    %c0_i32_1 = arith.constant 0 : i32
    return %c0_i32, %c0_i32_0 : i32, i32
  }
  func.func @transform_4(%arg0: i32) -> (i32, i32) {
    %c0_i32 = arith.constant 0 : i32
    %c0_i32_0 = arith.constant 0 : i32
    %c0_i32_1 = arith.constant 0 : i32
    return %c0_i32, %c0_i32_0 : i32, i32
  }
  func.func @transform_5(%arg0: i32) -> (i32, i32) {
    %c0_i32 = arith.constant 0 : i32
    %c0_i32_0 = arith.constant 0 : i32
    %c0_i32_1 = arith.constant 0 : i32
    return %c0_i32, %c0_i32_0 : i32, i32
  }
  func.func @transform_6(%arg0: i32) -> (i32, i32) {
    %c0_i32 = arith.constant 0 : i32
    %c0_i32_0 = arith.constant 0 : i32
    %c0_i32_1 = arith.constant 0 : i32
    return %c0_i32, %c0_i32_0 : i32, i32
  }
  func.func @transform_7(%arg0: i32) -> (i32, i32) {
    %c0_i32 = arith.constant 0 : i32
    %c0_i32_0 = arith.constant 0 : i32
    return %arg0, %c0_i32 : i32, i32
  }
  func.func @transform_8(%arg0: i32) -> (i32, i32) {
    %c0_i32 = arith.constant 0 : i32
    %c0_i32_0 = arith.constant 0 : i32
    return %arg0, %c0_i32 : i32, i32
  }
}

</mosaic_0001>

<llo_original>
// kernel: tpu_custom_call.1
$region0: #{tpu_custom_call.1}
  #allocation0 [shape = 'u32[]', space=smem, size = 0x4, offset = 0x4, fixed_abs, tag = 'smem constant byte address 0x4 - core index']
  #allocation1 [shape = 'u32[72,128]{1,0:T(1,128)}', space=vmem, size = 0x9000, scoped, tag = 'internal scratch']
  %s0 = inlined_call_operand.vmem [shape: f32[8,16], index: 0, kind: input, shape index: {}]
  %s1 = inlined_call_operand.vmem [shape: f32[16,128], index: 1, kind: input, shape index: {}]
  %s2 = inlined_call_operand.vmem [shape: f32[1,128], index: 2, kind: input, shape index: {}]
  %s3 = inlined_call_operand.vmem [shape: f32[128,16], index: 3, kind: input, shape index: {}]
  %s4 = inlined_call_operand.vmem [shape: f32[1,16], index: 4, kind: input, shape index: {}]
  %s5 = inlined_call_operand.vmem [shape: f32[16,128], index: 5, kind: input, shape index: {}]
  %s6 = inlined_call_operand.vmem [shape: f32[1,128], index: 6, kind: input, shape index: {}]
  %s7 = inlined_call_operand.hbm [shape: f32[8,128], index: 7, kind: output, shape index: {0}]
  %s8 = inlined_call_operand.hbm [shape: f32[8,16], index: 8, kind: output, shape index: {1}]
  %9 = xla_tuple %s7, %s8
  %s10 = sld [smem:[#allocation0]]
  $region46: #{tpu_custom_call.1} parent=0
    _
  %s12 = ssub.s32 1, %s10
  %s13 = scalar_select 0, %s12, %s10
  $region1: #{tpu_custom_call.1} parent=0
    #allocation2 [shape = 'u8[4096]{0}', space=vmem, size = 0x1000, scoped, tag = 'output window, operand 0, single buffered']
    #allocation3 [shape = 's32[1]{0}', space=sflag, size = 0x4, scoped, tag = 'scoped memory for tpu_custom_call.1']
    #allocation4 [shape = 'u8[4096]{0}', space=vmem, size = 0x1000, scoped, tag = 'output window, operand 1, single buffered']
    #allocation5 [shape = 's32[1]{0}', space=sflag, size = 0x4, scoped, tag = 'scoped memory for tpu_custom_call.1']
    %14 = vsyncpa [#allocation3], 0
    %15 = vsyncpa [#allocation5], 0
    // Predicated region
    $region2: #{tpu_custom_call.1} parent=1 // pred_check
      _
    $region3: #{tpu_custom_call.1} parent=1 // pred_check_branch
      %17 = sbr.rel (0) target = $region5
    $region4: #{tpu_custom_call.1} parent=1 // pred_region
      _
    $region5: #{tpu_custom_call.1} parent=1 // pred_fallthru
      _
    // Predicated region
    $region6: #{tpu_custom_call.1} parent=1 // pred_check
      _
    $region7: #{tpu_custom_call.1} parent=1 // pred_check_branch
      %19 = sbr.rel (0) target = $region9
    $region8: #{tpu_custom_call.1} parent=1 // pred_region
      _
    $region9: #{tpu_custom_call.1} parent=1 // pred_fallthru
      _
    // Predicated region
    $region10: #{tpu_custom_call.1} parent=1 // pred_check
      _
    $region11: #{tpu_custom_call.1} parent=1 // pred_check_branch
      %21 = sbr.rel (0) target = $region13
    $region12: #{tpu_custom_call.1} parent=1 // pred_region
      _
    $region13: #{tpu_custom_call.1} parent=1 // pred_fallthru
      _
    // Predicated region
    $region14: #{tpu_custom_call.1} parent=1 // pred_check
      _
    $region15: #{tpu_custom_call.1} parent=1 // pred_check_branch
      %23 = sbr.rel (0) target = $region17
    $region16: #{tpu_custom_call.1} parent=1 // pred_region
      _
    $region17: #{tpu_custom_call.1} parent=1 // pred_fallthru
      _
    // Predicated region
    $region18: #{tpu_custom_call.1} parent=1 // pred_check
      _
    $region19: #{tpu_custom_call.1} parent=1 // pred_check_branch
      %25 = sbr.rel (0) target = $region21
    $region20: #{tpu_custom_call.1} parent=1 // pred_region
      _
    $region21: #{tpu_custom_call.1} parent=1 // pred_fallthru
      _
    // Predicated region
    $region22: #{tpu_custom_call.1} parent=1 // pred_check
      _
    $region23: #{tpu_custom_call.1} parent=1 // pred_check_branch
      %27 = sbr.rel (0) target = $region25
    $region24: #{tpu_custom_call.1} parent=1 // pred_region
      _
    $region25: #{tpu_custom_call.1} parent=1 // pred_fallthru
      _
    // Predicated region
    $region26: #{tpu_custom_call.1} parent=1 // pred_check
      _
    $region27: #{tpu_custom_call.1} parent=1 // pred_check_branch
      %29 = sbr.rel (0) target = $region29
    $region28: #{tpu_custom_call.1} parent=1 // pred_region
      _
    $region29: #{tpu_custom_call.1} parent=1 // pred_fallthru
      _
    %v30 = vld [vmem:[%s0] sm:$0xff]
    %v31 = vld [vmem:[%s1] sm:$0xff]
    %v32 = vld [vmem:[%s1 + $0x8] sm:$0xff]
    %v33 = vld [vmem:[%s2] sm:$0x1]
    %v35 = vperm.slane %v33, 0
    %vm37 = vcmask 130048
    %v39 = vsel %vm37, %v30, 0
    %41 = vmatpush.msra.mxu0 0.0
    %42 = vmatpush.msra.mxu0 0.0
    %43 = vmatpush.msra.mxu0 0.0
    %44 = vmatpush.msra.mxu0 0.0
    %45 = vmatpush.msra.mxu0 0.0
    %46 = vmatpush.msra.mxu0 0.0
    %47 = vmatpush.msra.mxu0 0.0
    %48 = vmatpush.msra.mxu0 0.0
    %49 = vmatpush.msra.mxu0 0.0
    %50 = vmatpush.msra.mxu0 0.0
    %51 = vmatpush.msra.mxu0 0.0
    %52 = vmatpush.msra.mxu0 0.0
    %53 = vmatpush.msra.mxu0 0.0
    %54 = vmatpush.msra.mxu0 0.0
    %55 = vmatpush.msra.mxu0 %v32
    %56 = vmatpush.msra.mxu0 %v31
    %57 = vmatmul.f32.gmra.mxu0 %v39
    %v58 = vpop.f32.mrf.mxu0
    %v59 = vadd.f32 %v35, %v58
    %60 = vdwg.mxu0
    %v61 = vmax.f32 %v59, 0.0
    %v62 = vld [vmem:[%s3] sm:$0xff]
    %v63 = vld [vmem:[%s3 + $0x8] sm:$0xff]
    %v64 = vld [vmem:[%s3 + $0x10] sm:$0xff]
    %v65 = vld [vmem:[%s3 + $0x18] sm:$0xff]
    %v66 = vld [vmem:[%s3 + $0x20] sm:$0xff]
    %v67 = vld [vmem:[%s3 + $0x28] sm:$0xff]
    %v68 = vld [vmem:[%s3 + $0x30] sm:$0xff]
    %v69 = vld [vmem:[%s3 + $0x38] sm:$0xff]
    %v70 = vld [vmem:[%s3 + $0x40] sm:$0xff]
    %v71 = vld [vmem:[%s3 + $0x48] sm:$0xff]
    %v72 = vld [vmem:[%s3 + $0x50] sm:$0xff]
    %v73 = vld [vmem:[%s3 + $0x58] sm:$0xff]
    %v74 = vld [vmem:[%s3 + $0x60] sm:$0xff]
    %v75 = vld [vmem:[%s3 + $0x68] sm:$0xff]
    %v76 = vld [vmem:[%s3 + $0x70] sm:$0xff]
    %v77 = vld [vmem:[%s3 + $0x78] sm:$0xff]
    %v78 = vld [vmem:[%s4] sm:$0x1]
    %v80 = vperm.slane %v78, 0
    %82 = vmatpush.msra.mxu0 %v77
    %83 = vmatpush.msra.mxu0 %v76
    %84 = vmatpush.msra.mxu0 %v75
    %85 = vmatpush.msra.mxu0 %v74
    %86 = vmatpush.msra.mxu0 %v73
    %87 = vmatpush.msra.mxu0 %v72
    %88 = vmatpush.msra.mxu0 %v71
    %89 = vmatpush.msra.mxu0 %v70
    %90 = vmatpush.msra.mxu0 %v69
    %91 = vmatpush.msra.mxu0 %v68
    %92 = vmatpush.msra.mxu0 %v67
    %93 = vmatpush.msra.mxu0 %v66
    %94 = vmatpush.msra.mxu0 %v65
    %95 = vmatpush.msra.mxu0 %v64
    %96 = vmatpush.msra.mxu0 %v63
    %97 = vmatpush.msra.mxu0 %v62
    %98 = vmatmul.f32.gmra.mxu0 %v61
    %v99 = vpop.f32.mrf.mxu0
    %v100 = vadd.f32 %v80, %v99
    %101 = vdwg.mxu0
    %v102 = vxor.u32 %v100, 2147483648
    %v103 = vmul.f32 %v102, 1.442695
    %v104 = vpow.pop %v103
    %v105 = vadd.f32 %v104, 1.0
    %v106 = vrcp.pop %v105
    %v107 = vmul.f32 %v105, %v106
    %v108 = vsub.f32 1.0, %v107
    %v109 = vmul.f32 %v106, %v108
    %v110 = vadd.f32 %v106, %v109
    %vm111 = vweird.f32 %v105
    %vm112 = vweird.f32 %v106
    %vm113 = vmor %vm111, %vm112
    %v114 = vsel %vm113, %v106, %v110
    %v115 = vand.u32 2147483647, %v105
    %vm116 = vcmp.eq.f32.partialorder %v115, 8.507059e+37
    %v117 = vand.u32 %v105, 2147483648
    %v118 = vor.u32 1.1754944e-38, %v117
    %v119 = vsel %vm116, %v118, %v114
    %v120 = vmul.f32 1.0, %v119
    %121 = vst.msk [vmem:[#allocation4] sm:$0xff] %vm37, %v120
    %v122 = vmul.f32 %v120, %v30
    %v123 = vld [vmem:[%s5] sm:$0xff]
    %v124 = vld [vmem:[%s5 + $0x8] sm:$0xff]
    %v125 = vld [vmem:[%s6] sm:$0x1]
    %v127 = vperm.slane %v125, 0
    %v130 = vsel %vm37, %v122, 0
    %132 = vmatpush.msra.mxu0 0.0
    %133 = vmatpush.msra.mxu0 0.0
    %134 = vmatpush.msra.mxu0 0.0
    %135 = vmatpush.msra.mxu0 0.0
    %136 = vmatpush.msra.mxu0 0.0
    %137 = vmatpush.msra.mxu0 0.0
    %138 = vmatpush.msra.mxu0 0.0
    %139 = vmatpush.msra.mxu0 0.0
    %140 = vmatpush.msra.mxu0 0.0
    %141 = vmatpush.msra.mxu0 0.0
    %142 = vmatpush.msra.mxu0 0.0
    %143 = vmatpush.msra.mxu0 0.0
    %144 = vmatpush.msra.mxu0 0.0
    %145 = vmatpush.msra.mxu0 0.0
    %146 = vmatpush.msra.mxu0 %v124
    %147 = vmatpush.msra.mxu0 %v123
    %148 = vmatmul.f32.gmra.mxu0 %v130
    %v149 = vpop.f32.mrf.mxu0
    %v150 = vadd.f32 %v127, %v149
    %151 = vdwg.mxu0
    %152 = vst [vmem:[#allocation2] sm:$0xff] %v150
    // Predicated region
    $region30: #{tpu_custom_call.1} parent=1 // pred_check
      _
    $region31: #{tpu_custom_call.1} parent=1 // pred_check_branch
      %154 = sbr.rel (0) target = $region33
    $region32: #{tpu_custom_call.1} parent=1 // pred_region
      %156 = vsyncadd [#allocation3], 0
      %s158 = sshll.u32 [#allocation2], 4
      %s159 = int_to_ptr.vmem [resolvable:$true] %s158
      %s160 = sshll.u32 %s7, 4
      %s161 = int_to_ptr.hbm [resolvable:$true] %s160
      %163 = dma.vmem_to_hbm [thread:$0]  %s159, 128, %s161, [#allocation3]
    $region33: #{tpu_custom_call.1} parent=1 // pred_fallthru
      _
    // Predicated region
    $region34: #{tpu_custom_call.1} parent=1 // pred_check
      _
    $region35: #{tpu_custom_call.1} parent=1 // pred_check_branch
      %165 = sbr.rel (0) target = $region37
    $region36: #{tpu_custom_call.1} parent=1 // pred_region
      %167 = vsyncadd [#allocation5], 0
      %s169 = sshll.u32 [#allocation4], 4
      %s170 = int_to_ptr.vmem [resolvable:$true] %s169
      %s171 = sshll.u32 %s8, 4
      %s172 = int_to_ptr.hbm [resolvable:$true] %s171
      %174 = dma.vmem_to_hbm [thread:$0]  %s170, 128, %s172, [#allocation5]
    $region37: #{tpu_custom_call.1} parent=1 // pred_fallthru
      _
    // Predicated region
    $region38: #{tpu_custom_call.1} parent=1 // pred_check
      _
    $region39: #{tpu_custom_call.1} parent=1 // pred_check_branch
      %176 = sbr.rel (0) target = $region41
    $region40: #{tpu_custom_call.1} parent=1 // pred_region
      %178 = dma.done [#allocation3], 128
    $region41: #{tpu_custom_call.1} parent=1 // pred_fallthru
      _
    // Predicated region
    $region42: #{tpu_custom_call.1} parent=1 // pred_check
      _
    $region43: #{tpu_custom_call.1} parent=1 // pred_check_branch
      %180 = sbr.rel (0) target = $region45
    $region44: #{tpu_custom_call.1} parent=1 // pred_region
      %182 = dma.done [#allocation5], 128
    $region45: #{tpu_custom_call.1} parent=1 // pred_fallthru
      _
    %183 = vsyncpa [#allocation3], 1
    %184 = vsyncpa [#allocation5], 1

</llo_original>
